<compile_context>
chip_gen: v7x
topology: tpu7x:2x2x1
jax: 0.10.0
libtpu: 0.0.40
codegen_flags: <defaults>
</compile_context>

<pallas_src>
import functools

import jax
import jax.numpy as jnp
from jax.experimental import pallas as pl
from jax.experimental.pallas import tpu as pltpu


# --------------------------------------------------------------------------- #
# Kernel
# --------------------------------------------------------------------------- #
def _stsc_temporal_conv_kernel(x_ref, w_ref, o_ref, *,
                               time_rf, pad, t_in, t_out, rpt):
    """Depthwise temporal conv on one tile; zero time-padding fused via tap ranges.

    The leading axis of x_ref / o_ref is the fused (time, batch) axis with
    `rpt` (= batch) rows per timestep:
      dimension=2: x_ref (t_in*rpt, bN),      w_ref (time_rf, bN)
      dimension=4: x_ref (t_in*rpt, bC, bSP), w_ref (time_rf, bC, 1)
    Taps are accumulated in values (vregs / compiler temps); every output row
    range is stored exactly once (no accumulator scratch, no RMW passes).
    """
    def w_tap(k):
        return w_ref[k:k + 1].astype(jnp.float32)          # broadcasts over rows/lanes

    def x_rows(t0, t1, k):
        s = k - pad
        return x_ref[(t0 + s) * rpt:(t1 + s) * rpt].astype(jnp.float32)

    # Interior output timesteps: every tap hits valid input -> one wide store.
    ilo = min(pad, t_out)
    ihi = max(ilo, t_out - pad)
    if ihi > ilo:
        acc = x_rows(ilo, ihi, 0) * w_tap(0)
        for k in range(1, time_rf):                         # static, tiny tap loop
            acc = acc + x_rows(ilo, ihi, k) * w_tap(k)
        o_ref[ilo * rpt:ihi * rpt] = acc.astype(o_ref.dtype)

    # Boundary timesteps (at most 2*pad of them): taps that fall in the zero
    # padding are simply dropped; each writes one small row slab.
    for t in tuple(range(ilo)) + tuple(range(ihi, t_out)):
        acc = None
        for k in range(time_rf):
            if 0 <= t + k - pad < t_in:
                c = x_rows(t, t + 1, k) * w_tap(k)
                acc = c if acc is None else acc + c
        if acc is None:                                     # degenerate: all taps padded
            acc = jnp.zeros((rpt,) + tuple(o_ref.shape[1:]), jnp.float32)
        o_ref[t * rpt:(t + 1) * rpt] = acc.astype(o_ref.dtype)


# --------------------------------------------------------------------------- #
# Generation-aware tiling
# --------------------------------------------------------------------------- #
def _gen_params():
    """Block byte target, scoped-VMEM limit and minimum grid step count per chip."""
    vmem_cap = 128 * 1024 * 1024
    try:
        vmem_cap = int(pltpu.get_tpu_info().vmem_capacity_bytes)
    except Exception:
        pass
    if vmem_cap >= 100 * 1024 * 1024:
        # v5e / v6e: 128 MiB physical VMEM -> larger blocks amortize per-step overhead.
        return {"block_bytes": 4 << 20, "vmem_limit": 64 << 20, "min_steps": 2}
    # v7x: 64 MiB physical VMEM, 2 TensorCores -> smaller budget, >= 4 grid steps
    # so megacore sharding can use both cores' DMA paths.
    return {"block_bytes": 3 << 20, "vmem_limit": 32 << 20, "min_steps": 4}


def _pick_lane_block(n_lanes, rows_in, rows_out, itemsize, block_bytes, min_steps):
    """Lane tile for the 2-D (T*B, N) view: multiple of 128, or full N when small."""
    if n_lanes <= 128:
        return int(n_lanes)
    per_lane = (rows_in + rows_out) * itemsize
    by_bytes = max(128, (block_bytes // max(1, per_lane)) // 128 * 128)
    by_steps = max(128, (n_lanes // max(1, min_steps)) // 128 * 128)
    return int(max(128, min(by_bytes, by_steps)))


def _pick_dim4_blocks(rows_in, rows_out, n_ch, n_sp, itemsize, block_bytes, min_steps):
    """(channel tile, spatial tile) for the 3-D (T*B, C, H*W) view."""
    can_tile_c = n_ch > 8 and n_ch % 8 == 0
    bc_min = 8 if can_tile_c else n_ch
    # Spatial (lane) tile: multiple of 128, or the full extent.
    per_lane = (rows_in + rows_out) * bc_min * itemsize
    by_bytes = block_bytes // max(1, per_lane)
    if n_sp <= 128 or by_bytes >= n_sp:
        bsp = n_sp
    else:
        bsp = max(128, min((n_sp // 128) * 128, (by_bytes // 128) * 128))
    lane_pad = max(bsp, 128)                    # VMEM lane tiles are 128 wide
    # Channel (sublane) tile: multiple of 8, or the full C; shrink for megacore.
    if can_tile_c:
        per_c = (rows_in + rows_out) * lane_pad * itemsize
        bc = max(8, min(n_ch, (block_bytes // max(1, per_c)) // 8 * 8))
        while (pl.cdiv(n_ch, bc) * pl.cdiv(n_sp, bsp)) < min_steps and bc > 8:
            nbc = (bc // 2 // 8) * 8
            if nbc < 8:
                break
            bc = nbc
    else:
        bc = n_ch
    return int(bc), int(bsp)


# --------------------------------------------------------------------------- #
# Wrapper
# --------------------------------------------------------------------------- #
def stsc_temporal_conv_forward(x_seq, weight, *, dimension=2, time_rf=2):
    """Pallas implementation of STSC_Temporal_Conv.forward.

    dimension=2: x_seq [T, B, N],       weight [N, time_rf]
    dimension=4: x_seq [T, B, C, H, W], weight [C, time_rf]
    """
    assert dimension in (2, 4)
    pad = (time_rf - 1) // 2
    itemsize = jnp.dtype(x_seq.dtype).itemsize
    params = _gen_params()

    if dimension == 2:
        assert x_seq.ndim == 3
        T, B, N = x_seq.shape
        t_out = T + 2 * pad - time_rf + 1
        assert t_out >= 1, "sequence too short for the temporal receptive field"
        x2 = x_seq.reshape(T * B, N)                       # free contiguous reshape
        w2 = jnp.transpose(weight)                         # (time_rf, N), tiny
        bn = _pick_lane_block(N, T * B, t_out * B, itemsize,
                              params["block_bytes"], params["min_steps"])
        grid = (pl.cdiv(N, bn),)
        kernel = functools.partial(_stsc_temporal_conv_kernel,
                                   time_rf=time_rf, pad=pad,
                                   t_in=T, t_out=t_out, rpt=B)
        out2 = pl.pallas_call(
            kernel,
            out_shape=jax.ShapeDtypeStruct((t_out * B, N), x_seq.dtype),
            grid_spec=pltpu.PrefetchScalarGridSpec(
                num_scalar_prefetch=0,
                grid=grid,
                in_specs=[
                    pl.BlockSpec((T * B, bn), lambda j: (0, j)),
                    pl.BlockSpec((time_rf, bn), lambda j: (0, j)),
                ],
                out_specs=pl.BlockSpec((t_out * B, bn), lambda j: (0, j)),
            ),
            compiler_params=pltpu.CompilerParams(
                dimension_semantics=("parallel",),
                vmem_limit_bytes=params["vmem_limit"]),
        )(x2, w2)
        return out2.reshape(t_out, B, N)

    # dimension == 4
    assert x_seq.ndim == 5
    T, B, C, H, W = x_seq.shape
    HW = H * W
    t_out = T + 2 * pad - time_rf + 1
    assert t_out >= 1, "sequence too short for the temporal receptive field"
    x3 = x_seq.reshape(T * B, C, HW)                       # free contiguous reshape
    w3 = jnp.transpose(weight)[:, :, None]                 # (time_rf, C, 1), tiny
    bc, bsp = _pick_dim4_blocks(T * B, t_out * B, C, HW, itemsize,
                                params["block_bytes"], params["min_steps"])
    # Channel axis outer, spatial axis inner -> weight block index is constant
    # along the inner axis and stays resident across those steps.
    grid = (pl.cdiv(C, bc), pl.cdiv(HW, bsp))
    kernel = functools.partial(_stsc_temporal_conv_kernel,
                               time_rf=time_rf, pad=pad,
                               t_in=T, t_out=t_out, rpt=B)
    out3 = pl.pallas_call(
        kernel,
        out_shape=jax.ShapeDtypeStruct((t_out * B, C, HW), x_seq.dtype),
        grid_spec=pltpu.PrefetchScalarGridSpec(
            num_scalar_prefetch=0,
            grid=grid,
            in_specs=[
                pl.BlockSpec((T * B, bc, bsp), lambda ci, sj: (0, ci, sj)),
                pl.BlockSpec((time_rf, bc, 1), lambda ci, sj: (0, ci, 0)),
            ],
            out_specs=pl.BlockSpec((t_out * B, bc, bsp), lambda ci, sj: (0, ci, sj)),
        ),
        compiler_params=pltpu.CompilerParams(
            dimension_semantics=("parallel", "parallel"),
            vmem_limit_bytes=params["vmem_limit"]),
    )(x3, w3)
    return out3.reshape(t_out, B, C, H, W)


# --------------------------------------------------------------------------- #
# Pure-JAX reference (matches the PyTorch module: cross-correlation, zero pad)
# --------------------------------------------------------------------------- #
def _reference_forward(x_seq, weight, *, dimension=2, time_rf=2):
    pad = (time_rf - 1) // 2
    if dimension == 2:
        T, B, N = x_seq.shape
        xp = jnp.pad(x_seq, ((pad, pad), (0, 0), (0, 0)))
        t_out = T + 2 * pad - time_rf + 1
        out = jnp.zeros((t_out, B, N), jnp.float32)
        for k in range(time_rf):
            out = out + xp[k:k + t_out].astype(jnp.float32) * weight[:, k][None, None, :]
        return out.astype(x_seq.dtype)
    T, B, C, H, W = x_seq.shape
    xp = jnp.pad(x_seq, ((pad, pad), (0, 0), (0, 0), (0, 0), (0, 0)))
    t_out = T + 2 * pad - time_rf + 1
    out = jnp.zeros((t_out, B, C, H, W), jnp.float32)
    for k in range(time_rf):
        out = out + (xp[k:k + t_out].astype(jnp.float32)
                     * weight[:, k][None, None, :, None, None])
    return out.astype(x_seq.dtype)


if __name__ == "__main__":
    key = jax.random.PRNGKey(0)
    ks = jax.random.split(key, 8)

    # ---- dimension=2, time_rf=2 (module default: padding=0, T_out=T-1)
    T, B, N = 8, 2, 256
    x3d = jax.random.normal(ks[0], (T, B, N), jnp.float32)
    w2 = (jax.random.uniform(ks[1], (N, 2), jnp.float32) - 0.5)
    out = jax.block_until_ready(
        stsc_temporal_conv_forward(x3d, w2, dimension=2, time_rf=2))
    ref = _reference_forward(x3d, w2, dimension=2, time_rf=2)
    assert out.shape == (T - 1, B, N), out.shape
    assert jnp.allclose(out, ref, atol=1e-5, rtol=1e-5)

    # ---- dimension=2, time_rf=3 (pad=1: boundary-timestep path + ragged lane tiles)
    N2 = 300
    x3d_b = jax.random.normal(ks[2], (T, B, N2), jnp.float32)
    w3 = (jax.random.uniform(ks[3], (N2, 3), jnp.float32) - 0.5)
    out = jax.block_until_ready(
        stsc_temporal_conv_forward(x3d_b, w3, dimension=2, time_rf=3))
    ref = _reference_forward(x3d_b, w3, dimension=2, time_rf=3)
    assert out.shape == (T, B, N2), out.shape
    assert jnp.allclose(out, ref, atol=1e-5, rtol=1e-5)

    # ---- dimension=4, time_rf=3, small spatial extent (full-dim blocks)
    C, H, W = 4, 4, 4
    x5d = jax.random.normal(ks[4], (T, B, C, H, W), jnp.float32)
    w4 = (jax.random.uniform(ks[5], (C, 3), jnp.float32) - 0.5)
    out = jax.block_until_ready(
        stsc_temporal_conv_forward(x5d, w4, dimension=4, time_rf=3))
    ref = _reference_forward(x5d, w4, dimension=4, time_rf=3)
    assert out.shape == (T, B, C, H, W), out.shape
    assert jnp.allclose(out, ref, atol=1e-5, rtol=1e-5)

    # ---- dimension=4, time_rf=2, larger spatial extent + channel tiling (grid > 1)
    C2, H2, W2 = 16, 12, 12
    x5d_b = jax.random.normal(ks[6], (T, B, C2, H2, W2), jnp.float32)
    w5 = (jax.random.uniform(ks[7], (C2, 2), jnp.float32) - 0.5)
    out = jax.block_until_ready(
        stsc_temporal_conv_forward(x5d_b, w5, dimension=4, time_rf=2))
    ref = _reference_forward(x5d_b, w5, dimension=4, time_rf=2)
    assert out.shape == (T - 1, B, C2, H2, W2), out.shape
    assert jnp.allclose(out, ref, atol=1e-5, rtol=1e-5)

    print("KERNEL_OK")
</pallas_src>

<mosaic_0001>
module attributes {stable_mosaic.version = 11 : i64} {
  func.func @_stsc_temporal_conv_kernel(%arg0: i32, %arg1: memref<16x128xf32, #tpu.memory_space<vmem>>, %arg2: memref<2x128xf32, #tpu.memory_space<vmem>>, %arg3: memref<14x128xf32, #tpu.memory_space<vmem>>) attributes {dimension_semantics = [#tpu.dimension_semantics<parallel>], iteration_bounds = array<i64: 2>, scalar_prefetch = 0 : i64, scratch_operands = 0 : i64, tpu.core_type = #tpu.core_type<tc>, window_params = [{transform_indices = @transform_0, window_bounds = array<i64: 16, 128>}, {transform_indices = @transform_1, window_bounds = array<i64: 2, 128>}, {transform_indices = @transform_2, window_bounds = array<i64: 14, 128>}]} {
    %c0 = arith.constant 0 : index
    %c0_0 = arith.constant 0 : index
    %0 = vector.load %arg1[%c0, %c0_0] : memref<16x128xf32, #tpu.memory_space<vmem>>, vector<14x128xf32>
    %c0_1 = arith.constant 0 : index
    %c0_2 = arith.constant 0 : index
    %1 = vector.load %arg2[%c0_1, %c0_2] : memref<2x128xf32, #tpu.memory_space<vmem>>, vector<1x128xf32>
    %2 = vector.broadcast %1 : vector<1x128xf32> to vector<14x128xf32>
    %3 = arith.mulf %0, %2 : vector<14x128xf32>
    %c2 = arith.constant 2 : index
    %c0_3 = arith.constant 0 : index
    %4 = vector.load %arg1[%c2, %c0_3] : memref<16x128xf32, #tpu.memory_space<vmem>>, vector<14x128xf32>
    %c1 = arith.constant 1 : index
    %c0_4 = arith.constant 0 : index
    %5 = vector.load %arg2[%c1, %c0_4] : memref<2x128xf32, #tpu.memory_space<vmem>>, vector<1x128xf32>
    %6 = vector.broadcast %5 : vector<1x128xf32> to vector<14x128xf32>
    %7 = arith.mulf %4, %6 : vector<14x128xf32>
    %8 = arith.addf %3, %7 : vector<14x128xf32>
    %c0_5 = arith.constant 0 : index
    %c0_6 = arith.constant 0 : index
    %9 = vector.load %arg3[%c0_5, %c0_6] : memref<14x128xf32, #tpu.memory_space<vmem>>, vector<14x128xf32>
    tpu.vector_store %arg3[%c0_5, %c0_6], %8 {strides = array<i32>} : memref<14x128xf32, #tpu.memory_space<vmem>>, vector<14x128xf32>,
    return
  }
  func.func @transform_0(%arg0: i32) -> (i32, i32) {
    %c0_i32 = arith.constant 0 : i32
    %c0_i32_0 = arith.constant 0 : i32
    return %c0_i32, %arg0 : i32, i32
  }
  func.func @transform_1(%arg0: i32) -> (i32, i32) {
    %c0_i32 = arith.constant 0 : i32
    %c0_i32_0 = arith.constant 0 : i32
    return %c0_i32, %arg0 : i32, i32
  }
  func.func @transform_2(%arg0: i32) -> (i32, i32) {
    %c0_i32 = arith.constant 0 : i32
    %c0_i32_0 = arith.constant 0 : i32
    return %c0_i32, %arg0 : i32, i32
  }
}

</mosaic_0001>

<llo_original>
// kernel: tpu_custom_call.1
$region0: #{tpu_custom_call.1}
  #allocation0 [shape = 'u32[]', space=smem, size = 0x4, offset = 0x4, fixed_abs, tag = 'smem constant byte address 0x4 - core index']
  #allocation1 [shape = 'u32[144,128]{1,0:T(1,128)}', space=vmem, size = 0x12000, scoped, tag = 'internal scratch']
  %s0 = inlined_call_operand.hbm [shape: f32[16,256], index: 0, kind: input, shape index: {}]
  %s1 = inlined_call_operand.hbm [shape: f32[2,256], index: 1, kind: input, shape index: {}]
  %s2 = inlined_call_operand.hbm [shape: f32[14,256], index: 2, kind: output, shape index: {}]
  %s3 = sld [smem:[#allocation0]]
  $region49: #{tpu_custom_call.1} parent=0
    _
  %s5 = ssub.s32 1, %s3
  %s6 = scalar_select 0, %s5, %s3
  $region1: #{tpu_custom_call.1} parent=0
    #allocation2 [shape = 'u8[16384]{0}', space=vmem, size = 0x4000, scoped, tag = 'input window, operand 0']
    #allocation3 [shape = 's32[2]{0}', space=sflag, size = 0x8, scoped, tag = 'scoped memory for tpu_custom_call.1']
    #allocation4 [shape = 's32[2]{0}', space=sflag, size = 0x8, scoped, tag = 'scoped memory for tpu_custom_call.1']
    #allocation5 [shape = 'u8[2048]{0}', space=vmem, size = 0x800, scoped, tag = 'input window, operand 1']
    #allocation6 [shape = 's32[2]{0}', space=sflag, size = 0x8, scoped, tag = 'scoped memory for tpu_custom_call.1']
    #allocation7 [shape = 'u8[16384]{0}', space=vmem, size = 0x4000, scoped, tag = 'output window, operand 0']
    %7 = vsyncpa [#allocation3], 0
    %s8 = scalar_lea.sflag [#allocation3], 1
    %9 = vsyncpa %s8, 0
    %10 = vsyncpa [#allocation6], 0
    %s11 = scalar_lea.sflag [#allocation6], 1
    %12 = vsyncpa %s11, 0
    %13 = vsyncpa [#allocation4], 0
    %s14 = scalar_lea.sflag [#allocation4], 1
    %15 = vsyncpa %s14, 0
    loop: start=0, step=1, limit=4
    $region2: #{tpu_custom_call.1} parent=1 // loop_pre_header
      _
    $region3: #{tpu_custom_call.1} parent=1 // loop_header
      %s17 = sphi 0, %s21
      %p18 = scmp.ge.s32.totalorder %s17, 4
      %s27 = sphi 0, %s29
      %s30 = sphi 0, %s27
      %s31 = sphi 0, %s30
      %s47 = sphi 0, %s31
      %s53 = sphi 0, %s55
      %s56 = sphi 0, %s53
      %s57 = sphi 0, %s56
      %s73 = sphi 0, %s57
      %s79 = sphi 0, %s81
      %s82 = sphi 0, %s79
      %s83 = sphi 0, %s82
      %s99 = sphi 0, %s83
    $region4: #{tpu_custom_call.1} parent=1 // loop_header_branch
      %20 = sbr.rel (%p18) target = $region8
    $region5: #{tpu_custom_call.1} parent=1 // loop_body
      %s22 = ssub.s32 %s17, 1
      %s23 = ssub.s32 %s17, 2
      %s24 = sadd.s32 %s17, 1
      %s25 = ssub.s32 %s17, %s24
      %p26 = scmp.eq.s32.totalorder %s25, 0
      %s28 = sadd.s32 %s27, 1
      %s29 = scalar_select %p26, %s27, %s28
      %p32 = pneg %p26
      %p33 = scmp.eq.s32.totalorder %s17, 1
      %p34 = por %p32, %p33
      %p35 = scmp.ne.s32.totalorder %s27, %s30
      %p36 = scmp.eq.s32.totalorder %s17, 0
      %p37 = por %p35, %p36
      %p38 = scmp.ne.s32.totalorder %s27, %s30
      %p39 = scmp.eq.s32.totalorder %s22, 1
      %p40 = por %p38, %p39
      %p41 = scmp.ne.s32.totalorder %s30, %s31
      %p42 = scmp.eq.s32.totalorder %s22, 0
      %p43 = por %p41, %p42
      %p44 = scmp.ne.s32.totalorder %s30, %s31
      %p45 = scmp.eq.s32.totalorder %s23, 1
      %p46 = por %p44, %p45
      %p48 = scmp.ne.s32.totalorder %s31, %s47
      %p49 = scmp.eq.s32.totalorder %s23, 0
      %p50 = por %p48, %p49
      %s51 = ssub.s32 %s17, %s24
      %p52 = scmp.eq.s32.totalorder %s51, 0
      %s54 = sadd.s32 %s53, 1
      %s55 = scalar_select %p52, %s53, %s54
      %p58 = pneg %p52
      %p59 = scmp.eq.s32.totalorder %s17, 1
      %p60 = por %p58, %p59
      %p61 = scmp.ne.s32.totalorder %s53, %s56
      %p62 = scmp.eq.s32.totalorder %s17, 0
      %p63 = por %p61, %p62
      %p64 = scmp.ne.s32.totalorder %s53, %s56
      %p65 = scmp.eq.s32.totalorder %s22, 1
      %p66 = por %p64, %p65
      %p67 = scmp.ne.s32.totalorder %s56, %s57
      %p68 = scmp.eq.s32.totalorder %s22, 0
      %p69 = por %p67, %p68
      %p70 = scmp.ne.s32.totalorder %s56, %s57
      %p71 = scmp.eq.s32.totalorder %s23, 1
      %p72 = por %p70, %p71
      %p74 = scmp.ne.s32.totalorder %s57, %s73
      %p75 = scmp.eq.s32.totalorder %s23, 0
      %p76 = por %p74, %p75
      %s77 = ssub.s32 %s17, %s24
      %p78 = scmp.eq.s32.totalorder %s77, 0
      %s80 = sadd.s32 %s79, 1
      %s81 = scalar_select %p78, %s79, %s80
      %p84 = pneg %p78
      %p85 = scmp.eq.s32.totalorder %s17, 1
      %p86 = por %p84, %p85
      %p87 = scmp.ne.s32.totalorder %s79, %s82
      %p88 = scmp.eq.s32.totalorder %s17, 0
      %p89 = por %p87, %p88
      %p90 = scmp.ne.s32.totalorder %s79, %s82
      %p91 = scmp.eq.s32.totalorder %s22, 1
      %p92 = por %p90, %p91
      %p93 = scmp.ne.s32.totalorder %s82, %s83
      %p94 = scmp.eq.s32.totalorder %s22, 0
      %p95 = por %p93, %p94
      %p96 = scmp.ne.s32.totalorder %s82, %s83
      %p97 = scmp.eq.s32.totalorder %s23, 1
      %p98 = por %p96, %p97
      %p100 = scmp.ne.s32.totalorder %s83, %s99
      %p101 = scmp.eq.s32.totalorder %s23, 0
      %p102 = por %p100, %p101
      %p103 = scmp.le.s32.totalorder 1, %s17
      %p104 = scmp.lt.s32.totalorder %s17, 3
      %p105 = pnand %p103, %p104
      %p106 = pneg %p105
      // Predicated region
      $region9: #{tpu_custom_call.1} parent=5 // pred_check
        _
      $region10: #{tpu_custom_call.1} parent=5 // pred_check_branch
        %108 = sbr.rel (%p105) target = $region12
      $region11: #{tpu_custom_call.1} parent=5 // pred_region
        %s109 = ssub.s32 %s17, 1
      $region12: #{tpu_custom_call.1} parent=5 // pred_fallthru
        _
      %p110 = scmp.lt.s32.totalorder %s17, 2
      // Predicated region
      $region13: #{tpu_custom_call.1} parent=5 // pred_check
        %p111 = pneg %p110
      $region14: #{tpu_custom_call.1} parent=5 // pred_check_branch
        %113 = sbr.rel (%p111) target = $region16
      $region15: #{tpu_custom_call.1} parent=5 // pred_region
        // Predicated region
        $region17: #{tpu_custom_call.1} parent=15 // pred_check
          %p114 = pneg %p37
        $region18: #{tpu_custom_call.1} parent=15 // pred_check_branch
          %116 = sbr.rel (%p114) target = $region20
        $region19: #{tpu_custom_call.1} parent=15 // pred_region
          %s117 = sand.u32 %s27, 1
          %s118 = scalar_lea.sflag [#allocation3], %s117
          %s119 = sand.u32 %s27, 1
          %s120 = smul.addr %s119, 16
          %s121 = scalar_lea.vmem [#allocation2], %s120
          %s123 = ssub.s32 256, 256
          %124 = vsyncadd %s118, %s123
          %s125 = smul.addr %s17, 128
          %s126 = scalar_lea.hbm %s0, %s125
          %s127 = sshll.u32 %s121, 4
          %s128 = int_to_ptr.vmem [resolvable:$true] %s127
          %133 = dma.hbm_to_vmem [thread:$0]  %s126, 256, %s128, %s118, 256, 128, 8
        $region20: #{tpu_custom_call.1} parent=15 // pred_fallthru
          _
        // Predicated region
        $region21: #{tpu_custom_call.1} parent=15 // pred_check
          %p134 = pneg %p63
        $region22: #{tpu_custom_call.1} parent=15 // pred_check_branch
          %136 = sbr.rel (%p134) target = $region24
        $region23: #{tpu_custom_call.1} parent=15 // pred_region
          %s137 = sand.u32 %s53, 1
          %s138 = scalar_lea.sflag [#allocation6], %s137
          %s139 = sand.u32 %s53, 1
          %s140 = smul.addr %s139, 2
          %s141 = scalar_lea.vmem [#allocation5], %s140
          %s143 = ssub.s32 32, 32
          %144 = vsyncadd %s138, %s143
          %s145 = smul.addr %s17, 32
          %s146 = scalar_lea.hbm %s1, %s145
          %s148 = sshll.u32 %s141, 4
          %s149 = int_to_ptr.vmem [resolvable:$true] %s148
          %151 = dma.hbm_to_vmem [thread:$0]  %s146, 32, %s149, %s138
        $region24: #{tpu_custom_call.1} parent=15 // pred_fallthru
          _
      $region16: #{tpu_custom_call.1} parent=5 // pred_fallthru
        _
      %p152 = scmp.le.s32.totalorder 1, %s17
      %p153 = scmp.lt.s32.totalorder %s17, 3
      %p154 = pnand %p152, %p153
      %p155 = pneg %p154
      // Predicated region
      $region25: #{tpu_custom_call.1} parent=5 // pred_check
        _
      $region26: #{tpu_custom_call.1} parent=5 // pred_check_branch
        %157 = sbr.rel (%p154) target = $region28
      $region27: #{tpu_custom_call.1} parent=5 // pred_region
        %s158 = ssub.s32 %s17, 1
        %s159 = sand.u32 %s30, 1
        %s160 = scalar_lea.sflag [#allocation3], %s159
        %s161 = sand.u32 %s30, 1
        %s162 = smul.addr %s161, 16
        %s163 = scalar_lea.vmem [#allocation2], %s162
        // Predicated region
        $region29: #{tpu_custom_call.1} parent=27 // pred_check
          %p164 = pneg %p43
        $region30: #{tpu_custom_call.1} parent=27 // pred_check_branch
          %166 = sbr.rel (%p164) target = $region32
        $region31: #{tpu_custom_call.1} parent=27 // pred_region
          %167 = dma.done %s160, 256
        $region32: #{tpu_custom_call.1} parent=27 // pred_fallthru
          _
        %s168 = sand.u32 %s56, 1
        %s169 = scalar_lea.sflag [#allocation6], %s168
        %s170 = sand.u32 %s56, 1
        %s171 = smul.addr %s170, 2
        %s172 = scalar_lea.vmem [#allocation5], %s171
        // Predicated region
        $region33: #{tpu_custom_call.1} parent=27 // pred_check
          %p173 = pneg %p69
        $region34: #{tpu_custom_call.1} parent=27 // pred_check_branch
          %175 = sbr.rel (%p173) target = $region36
        $region35: #{tpu_custom_call.1} parent=27 // pred_region
          %176 = dma.done %s169, 32
        $region36: #{tpu_custom_call.1} parent=27 // pred_fallthru
          _
        %s177 = sand.u32 %s30, 1
        %s178 = scalar_lea.sflag [#allocation3], %s177
        %s179 = sand.u32 %s30, 1
        %s180 = smul.addr %s179, 16
        %s181 = scalar_lea.vmem [#allocation2], %s180
        %p182 = pneg %p43
        %p183 = pneg %p40
        %s184 = sand.u32 %s56, 1
        %s185 = scalar_lea.sflag [#allocation6], %s184
        %s186 = sand.u32 %s56, 1
        %s187 = smul.addr %s186, 2
        %s188 = scalar_lea.vmem [#allocation5], %s187
        %p189 = pneg %p69
        %p190 = pneg %p66
        %p191 = pneg %p95
        %p192 = pneg %p92
        %s193 = sand.u32 %s82, 1
        %s194 = scalar_lea.sflag [#allocation4], %s193
        %s195 = sand.u32 %s82, 1
        %s196 = smul.addr %s195, 16
        %s197 = scalar_lea.vmem [#allocation7], %s196
        %v198 = vld [vmem:[%s163] sm:$0xff]
        %v199 = vld [vmem:[%s163 + $0x8] sm:$0x3f]
        %v200 = vld [vmem:[%s172] sm:$0x1]
        %v201 = vlaneseq
        %v202 = vshrl.u32 %v201, 7
        %v203 = vsub.s32 0, %v202
        %v204 = vrot.slane %v200, %v203
        %v205 = vmul.f32 %v198, %v204
        %v206 = vmul.f32 %v199, %v204
        %v207 = vld [vmem:[%s163 + $0x2] sm:$0xff]
        %v208 = vld [vmem:[%s163 + $0xa] sm:$0x3f]
        %v209 = vld [vmem:[%s172 + $0x1] sm:$0x1]
        %v210 = vlaneseq
        %v211 = vshrl.u32 %v210, 7
        %v212 = vsub.s32 0, %v211
        %v213 = vrot.slane %v209, %v212
        %v214 = vmul.f32 %v207, %v213
        %v215 = vmul.f32 %v208, %v213
        %v216 = vadd.f32 %v205, %v214
        %v217 = vadd.f32 %v206, %v215
        %218 = vst [vmem:[%s197] sm:$0xff] %v216
        %219 = vst [vmem:[%s197 + $0x8] sm:$0x3f] %v217
        %s220 = sand.u32 %s82, 1
        %s221 = scalar_lea.sflag [#allocation4], %s220
        %s222 = sand.u32 %s82, 1
        %s223 = smul.addr %s222, 16
        %s224 = scalar_lea.vmem [#allocation7], %s223
        // Predicated region
        $region37: #{tpu_custom_call.1} parent=27 // pred_check
          %p225 = pneg %p92
        $region38: #{tpu_custom_call.1} parent=27 // pred_check_branch
          %227 = sbr.rel (%p225) target = $region40
        $region39: #{tpu_custom_call.1} parent=27 // pred_region
          %s229 = ssub.s32 256, 256
          %230 = vsyncadd %s221, %s229
          %s231 = smul.addr %s22, 128
          %s232 = scalar_lea.hbm %s2, %s231
          %s233 = sshll.u32 %s224, 4
          %s234 = int_to_ptr.vmem [resolvable:$true] %s233
          %239 = dma.vmem_to_hbm [thread:$0]  %s234, 256, %s232, %s221, 128, 256, 8
        $region40: #{tpu_custom_call.1} parent=27 // pred_fallthru
          _
      $region28: #{tpu_custom_call.1} parent=5 // pred_fallthru
        _
      %p240 = scmp.le.s32.totalorder 2, %s17
      // Predicated region
      $region41: #{tpu_custom_call.1} parent=5 // pred_check
        %p241 = pneg %p240
      $region42: #{tpu_custom_call.1} parent=5 // pred_check_branch
        %243 = sbr.rel (%p241) target = $region44
      $region43: #{tpu_custom_call.1} parent=5 // pred_region
        %s244 = ssub.s32 %s17, 2
        // Predicated region
        $region45: #{tpu_custom_call.1} parent=43 // pred_check
          %p245 = pneg %p98
        $region46: #{tpu_custom_call.1} parent=43 // pred_check_branch
          %247 = sbr.rel (%p245) target = $region48
        $region47: #{tpu_custom_call.1} parent=43 // pred_region
          %s248 = sand.u32 %s83, 1
          %s249 = scalar_lea.sflag [#allocation4], %s248
          %s250 = sand.u32 %s83, 1
          %s251 = smul.addr %s250, 16
          %s252 = scalar_lea.vmem [#allocation7], %s251
          %253 = dma.done %s249, 256
        $region48: #{tpu_custom_call.1} parent=43 // pred_fallthru
          _
      $region44: #{tpu_custom_call.1} parent=5 // pred_fallthru
        _
    $region6: #{tpu_custom_call.1} parent=1 // loop_footer
      %s21 = sadd.s32 1, %s17
    $region7: #{tpu_custom_call.1} parent=1 // loop_footer_branch
      %16 = sbr.rel target = $region3
    $region8: #{tpu_custom_call.1} parent=1 // loop_exit
      _
    %254 = vsyncpa [#allocation3], 1
    %s255 = scalar_lea.sflag [#allocation3], 1
    %256 = vsyncpa %s255, 1
    %257 = vsyncpa [#allocation6], 1
    %s258 = scalar_lea.sflag [#allocation6], 1
    %259 = vsyncpa %s258, 1
    %260 = vsyncpa [#allocation4], 1
    %s261 = scalar_lea.sflag [#allocation4], 1
    %262 = vsyncpa %s261, 1

</llo_original>
